<compile_context>
chip_gen: v7x
topology: tpu7x:2x2x1
jax: 0.10.0
libtpu: 0.0.40
codegen_flags: <defaults>
</compile_context>

<pallas_src>
import functools

import jax
import jax.numpy as jnp
from jax import lax
from jax.experimental import pallas as pl
from jax.experimental.pallas import tpu as pltpu


def _attention_kernel(q_ref, k_ref, v_ref, wp_ref, bp_ref,
                      out_ref, attn_ref, acc_ref, *,
                      group, head_dim, num_groups, n_valid):
    hg = pl.program_id(2)
    tq = q_ref.shape[2]
    n_pad = k_ref.shape[2]

    # Key-padding mask (only emitted when the wrapper actually padded N).
    if n_valid != n_pad:
        kv_idx = lax.broadcasted_iota(jnp.int32, (tq, n_pad), 1)
        kv_valid = kv_idx < n_valid

    o_parts = []
    for g in range(group):                      # short static unroll over heads
        q = q_ref[0, g]                         # (TQ,  Dh) bf16, scale pre-folded
        k = k_ref[0, g]                         # (Npad, Dh) bf16
        v = v_ref[0, g]                         # (Npad, Dh) bf16

        # Scores (TQ, Npad): contract over Dh without an explicit transpose.
        s = lax.dot_general(q, k, dimension_numbers=(((1,), (1,)), ((), ())),
                            preferred_element_type=jnp.float32)
        if n_valid != n_pad:
            s = jnp.where(kv_valid, s, -1e30)

        # Max-stabilized softmax; divide replaced by an EUP reciprocal.
        s = s - jnp.max(s, axis=-1, keepdims=True)
        e = jnp.exp(s)
        p = e * pl.reciprocal(jnp.sum(e, axis=-1, keepdims=True), approx=True)
        attn_ref[0, g] = p.astype(attn_ref.dtype)

        o_parts.append(
            jnp.dot(p.astype(jnp.bfloat16), v,
                    preferred_element_type=jnp.float32).astype(jnp.bfloat16))

    # Merge the group's heads: (TQ, G*Dh) bf16, column order = head-major,
    # matching the corresponding rows of W_proj.
    o = o_parts[0] if group == 1 else jnp.concatenate(o_parts, axis=-1)

    gw = group * head_dim
    if num_groups == 1:
        wp = wp_ref[...]                                   # full (C, C)
    else:
        row0 = pl.multiple_of(hg * gw, gw)
        wp = wp_ref[pl.ds(row0, gw), :]                    # this group's rows
    contrib = jnp.dot(o, wp, preferred_element_type=jnp.float32)

    @pl.when(hg == 0)
    def _():
        acc_ref[...] = jnp.broadcast_to(bp_ref[...], acc_ref.shape)

    acc_ref[...] += contrib

    @pl.when(hg == num_groups - 1)
    def _():
        out_ref[0] = acc_ref[...].astype(out_ref.dtype)


def attention_forward(x, w_qkv, b_qkv, w_proj, b_proj, heads, *,
                      tq=None, group=None, attn_dtype=jnp.bfloat16):
    """x: (B, N, C) f32. Returns (out (B,N,C) f32, attn (B,H,N,N) attn_dtype)."""
    B, N, C = x.shape
    dh = C // heads
    scale = dh ** (-0.5)

    # ---- One-time XLA precompute: QKV projection at full MXU width in f32,
    # scale folded into q, bf16 activations fed to the kernel. ----
    qkv = (x @ w_qkv + b_qkv).reshape(B, N, 3, heads, dh)
    qkv = jnp.transpose(qkv, (2, 0, 3, 1, 4))              # (3, B, H, N, Dh)
    q = (qkv[0] * scale).astype(jnp.bfloat16)
    k = qkv[1].astype(jnp.bfloat16)
    v = qkv[2].astype(jnp.bfloat16)

    # ---- Tile / padding choices (lane-dense attn stores for ViT-style N). ----
    def round_up(a, m):
        return (a + m - 1) // m * m

    if tq is None:
        # On v6e, tq=256 is worth trying when VMEM allows (fewer grid steps).
        tq = 128 if N > 128 else round_up(N, 8)
    n_pad = round_up(N, tq)
    if n_pad != N:
        pad = [(0, 0), (0, 0), (0, n_pad - N), (0, 0)]
        q, k, v = jnp.pad(q, pad), jnp.pad(k, pad), jnp.pad(v, pad)
    nq = n_pad // tq

    # ---- Head grouping: G*Dh <= 128 fills the MXU on v5e and stays cheap on
    # v6e/v7x (use 256 // dh there if targeting those parts specifically). ----
    if group is None:
        group = max(1, min(heads, 128 // max(dh, 1)))
    while heads % group:
        group -= 1
    num_groups = heads // group

    w_p = w_proj.astype(jnp.bfloat16)                      # (C, C) resident
    b_p = b_proj.reshape(1, C).astype(jnp.float32)

    kernel = functools.partial(_attention_kernel, group=group, head_dim=dh,
                               num_groups=num_groups, n_valid=N)

    attn_bytes = jnp.dtype(attn_dtype).itemsize
    flops = (4 * B * heads * n_pad * n_pad * dh            # q@k^T and attn@v
             + 2 * B * n_pad * C * C)                      # fused output proj
    bytes_accessed = (q.size * 2                           # q tiles
                      + 2 * nq * k.size * 2                # k/v refetched per q tile
                      + w_p.size * 2 + b_p.size * 4
                      + B * n_pad * C * 4                  # out writeback
                      + B * heads * n_pad * n_pad * attn_bytes)

    # Per-step VMEM budget: double-buffered blocks + f32 accumulator + softmax
    # temporaries; clamp to [32 MiB, 64 MiB] (v7x physical ceiling).
    blk = 2 * (group * tq * dh * 2 + 2 * group * n_pad * dh * 2 + C * C * 2
               + C * 4 + tq * C * 4 + group * tq * n_pad * attn_bytes)
    est = blk + tq * C * 4 + 4 * group * tq * n_pad * 4
    vmem_limit = int(min(64 * 2**20, max(32 * 2**20, 2 * est)))

    out, attn = pl.pallas_call(
        kernel,
        out_shape=(
            jax.ShapeDtypeStruct((B, n_pad, C), jnp.float32),
            jax.ShapeDtypeStruct((B, heads, n_pad, n_pad), attn_dtype),
        ),
        grid_spec=pltpu.PrefetchScalarGridSpec(
            num_scalar_prefetch=0,
            grid=(B, nq, num_groups),
            in_specs=[
                pl.BlockSpec((1, group, tq, dh),
                             lambda b, qi, hg: (b, hg, qi, 0)),      # q tile
                pl.BlockSpec((1, group, n_pad, dh),
                             lambda b, qi, hg: (b, hg, 0, 0)),       # k (group)
                pl.BlockSpec((1, group, n_pad, dh),
                             lambda b, qi, hg: (b, hg, 0, 0)),       # v (group)
                pl.BlockSpec((C, C), lambda b, qi, hg: (0, 0)),      # W_proj, resident
                pl.BlockSpec((1, C), lambda b, qi, hg: (0, 0)),      # b_proj, resident
            ],
            out_specs=[
                pl.BlockSpec((1, tq, C), lambda b, qi, hg: (b, qi, 0)),
                pl.BlockSpec((1, group, tq, n_pad),
                             lambda b, qi, hg: (b, hg, qi, 0)),
            ],
            scratch_shapes=[pltpu.VMEM((tq, C), jnp.float32)],
        ),
        compiler_params=pltpu.CompilerParams(
            dimension_semantics=("parallel", "parallel", "arbitrary"),
            vmem_limit_bytes=vmem_limit),
        cost_estimate=pl.CostEstimate(
            flops=flops,
            transcendentals=B * heads * n_pad * n_pad,
            bytes_accessed=bytes_accessed),
    )(q, k, v, w_p, b_p)

    if n_pad != N:
        out = out[:, :N]
        attn = attn[:, :, :N, :N]
    return out, attn


def _reference(x, w_qkv, b_qkv, w_proj, b_proj, heads):
    B, N, C = x.shape
    dh = C // heads
    scale = dh ** (-0.5)
    qkv = x @ w_qkv + b_qkv                                   # (B, N, 3C)
    qkv = qkv.reshape(B, N, 3, heads, dh).transpose(2, 0, 3, 1, 4)
    q, k, v = qkv[0], qkv[1], qkv[2]                          # (B, H, N, Dh)
    attn = (q @ jnp.swapaxes(k, -2, -1)) * scale
    attn = jax.nn.softmax(attn, axis=-1)
    o = (attn @ v).transpose(0, 2, 1, 3).reshape(B, N, C)
    o = o @ w_proj + b_proj
    return o, attn


if __name__ == "__main__":
    B, N, C, heads = 2, 8, 32, 4
    key = jax.random.PRNGKey(0)
    kx, k1, k2, k3, k4 = jax.random.split(key, 5)

    x = jax.random.normal(kx, (B, N, C), dtype=jnp.float32)
    # Deterministic synthetic parameters (shapes from nn.Linear(dim, dim*3),
    # nn.Linear(dim, dim)); stored pre-transposed as (in, out).
    w_qkv = jax.random.normal(k1, (C, 3 * C), dtype=jnp.float32) * 0.05
    b_qkv = jax.random.normal(k2, (3 * C,), dtype=jnp.float32) * 0.05
    w_proj = jax.random.normal(k3, (C, C), dtype=jnp.float32) * 0.05
    b_proj = jax.random.normal(k4, (C,), dtype=jnp.float32) * 0.05

    out, attn = attention_forward(x, w_qkv, b_qkv, w_proj, b_proj, heads)
    jax.block_until_ready((out, attn))

    ref_out, ref_attn = _reference(x, w_qkv, b_qkv, w_proj, b_proj, heads)
    # bf16 MXU feeds, bf16 attn output + approx reciprocal => loose tolerance.
    assert jnp.allclose(out, ref_out, atol=3e-2, rtol=3e-2), \
        float(jnp.max(jnp.abs(out - ref_out)))
    assert jnp.allclose(attn.astype(jnp.float32), ref_attn,
                        atol=2e-2, rtol=2e-2), \
        float(jnp.max(jnp.abs(attn.astype(jnp.float32) - ref_attn)))

    print("KERNEL_OK")
</pallas_src>

<mosaic_0001>
module attributes {stable_mosaic.version = 11 : i64} {
  func.func @_attention_kernel(%arg0: i32, %arg1: i32, %arg2: i32, %arg3: memref<1x4x8x8xbf16, #tpu.memory_space<vmem>>, %arg4: memref<1x4x8x8xbf16, #tpu.memory_space<vmem>>, %arg5: memref<1x4x8x8xbf16, #tpu.memory_space<vmem>>, %arg6: memref<32x32xbf16, #tpu.memory_space<vmem>>, %arg7: memref<1x32xf32, #tpu.memory_space<vmem>>, %arg8: memref<1x8x32xf32, #tpu.memory_space<vmem>>, %arg9: memref<1x4x8x8xbf16, #tpu.memory_space<vmem>>, %arg10: memref<8x32xf32, #tpu.memory_space<vmem>>) attributes {dimension_semantics = [#tpu.dimension_semantics<parallel>, #tpu.dimension_semantics<parallel>, #tpu.dimension_semantics<arbitrary>], iteration_bounds = array<i64: 2, 1, 1>, scalar_prefetch = 0 : i64, scratch_operands = 1 : i64, tpu.core_type = #tpu.core_type<tc>, window_params = [{transform_indices = @transform_0, window_bounds = array<i64: 1, 4, 8, 8>}, {transform_indices = @transform_1, window_bounds = array<i64: 1, 4, 8, 8>}, {transform_indices = @transform_2, window_bounds = array<i64: 1, 4, 8, 8>}, {pipeline_mode = #tpu.pipeline_mode<synchronous>, transform_indices = @transform_3, window_bounds = array<i64: 32, 32>}, {pipeline_mode = #tpu.pipeline_mode<synchronous>, transform_indices = @transform_4, window_bounds = array<i64: 1, 32>}, {transform_indices = @transform_5, window_bounds = array<i64: 1, 8, 32>}, {transform_indices = @transform_6, window_bounds = array<i64: 1, 4, 8, 8>}]} {
    %c0 = arith.constant 0 : index
    %c0_0 = arith.constant 0 : index
    %c0_1 = arith.constant 0 : index
    %c0_2 = arith.constant 0 : index
    %0 = vector.load %arg3[%c0, %c0_0, %c0_1, %c0_2] : memref<1x4x8x8xbf16, #tpu.memory_space<vmem>>, vector<1x1x8x8xbf16>
    %1 = vector.shape_cast %0 : vector<1x1x8x8xbf16> to vector<8x8xbf16>
    %c0_3 = arith.constant 0 : index
    %c0_4 = arith.constant 0 : index
    %c0_5 = arith.constant 0 : index
    %c0_6 = arith.constant 0 : index
    %2 = vector.load %arg4[%c0_3, %c0_4, %c0_5, %c0_6] : memref<1x4x8x8xbf16, #tpu.memory_space<vmem>>, vector<1x1x8x8xbf16>
    %3 = vector.shape_cast %2 : vector<1x1x8x8xbf16> to vector<8x8xbf16>
    %c0_7 = arith.constant 0 : index
    %c0_8 = arith.constant 0 : index
    %c0_9 = arith.constant 0 : index
    %c0_10 = arith.constant 0 : index
    %4 = vector.load %arg5[%c0_7, %c0_8, %c0_9, %c0_10] : memref<1x4x8x8xbf16, #tpu.memory_space<vmem>>, vector<1x1x8x8xbf16>
    %5 = vector.shape_cast %4 : vector<1x1x8x8xbf16> to vector<8x8xbf16>
    %cst = arith.constant dense<0.000000e+00> : vector<8x8xf32>
    %6 = tpu.matmul %1, %3, %cst {dimension_numbers = #tpu.dot_dimension_numbers<[1], [1], [0], [0], [0, 0, 1, 0], [], []>} : vector<8x8xbf16>, vector<8x8xbf16>, vector<8x8xf32> -> vector<8x8xf32>
    %cst_11 = arith.constant dense<0xFF800000> : vector<8xf32>
    %7 = vector.multi_reduction <maximumf>, %6, %cst_11 [1] : vector<8x8xf32> to vector<8xf32>
    %8 = vector.shape_cast %7 : vector<8xf32> to vector<8x1xf32>
    %9 = vector.broadcast %8 : vector<8x1xf32> to vector<8x8xf32>
    %10 = arith.subf %6, %9 : vector<8x8xf32>
    %11 = math.exp %10 : vector<8x8xf32>
    %cst_12 = arith.constant dense<0.000000e+00> : vector<8xf32>
    %12 = vector.multi_reduction <add>, %11, %cst_12 [1] : vector<8x8xf32> to vector<8xf32>
    %13 = vector.shape_cast %12 : vector<8xf32> to vector<8x1xf32>
    %14 = tpu.reciprocal %13 {approx = true} : vector<8x1xf32> -> vector<8x1xf32>
    %15 = vector.broadcast %14 : vector<8x1xf32> to vector<8x8xf32>
    %16 = arith.mulf %11, %15 : vector<8x8xf32>
    %17 = arith.truncf %16 : vector<8x8xf32> to vector<8x8xbf16>
    %c0_13 = arith.constant 0 : index
    %c0_14 = arith.constant 0 : index
    %c0_15 = arith.constant 0 : index
    %c0_16 = arith.constant 0 : index
    %18 = vector.load %arg9[%c0_13, %c0_14, %c0_15, %c0_16] : memref<1x4x8x8xbf16, #tpu.memory_space<vmem>>, vector<1x1x8x8xbf16>
    %19 = vector.shape_cast %18 : vector<1x1x8x8xbf16> to vector<8x8xbf16>
    %20 = vector.shape_cast %17 : vector<8x8xbf16> to vector<1x1x8x8xbf16>
    tpu.vector_store %arg9[%c0_13, %c0_14, %c0_15, %c0_16], %20 {strides = array<i32>} : memref<1x4x8x8xbf16, #tpu.memory_space<vmem>>, vector<1x1x8x8xbf16>,
    %21 = arith.truncf %16 : vector<8x8xf32> to vector<8x8xbf16>
    %cst_17 = arith.constant dense<0.000000e+00> : vector<8x8xf32>
    %22 = tpu.matmul %21, %5, %cst_17 {dimension_numbers = #tpu.dot_dimension_numbers<[1], [0], [0], [1], [0, 0, 1, 1], [], []>} : vector<8x8xbf16>, vector<8x8xbf16>, vector<8x8xf32> -> vector<8x8xf32>
    %23 = arith.truncf %22 : vector<8x8xf32> to vector<8x8xbf16>
    %c0_18 = arith.constant 0 : index
    %c1 = arith.constant 1 : index
    %c0_19 = arith.constant 0 : index
    %c0_20 = arith.constant 0 : index
    %24 = vector.load %arg3[%c0_18, %c1, %c0_19, %c0_20] : memref<1x4x8x8xbf16, #tpu.memory_space<vmem>>, vector<1x1x8x8xbf16>
    %25 = vector.shape_cast %24 : vector<1x1x8x8xbf16> to vector<8x8xbf16>
    %c0_21 = arith.constant 0 : index
    %c1_22 = arith.constant 1 : index
    %c0_23 = arith.constant 0 : index
    %c0_24 = arith.constant 0 : index
    %26 = vector.load %arg4[%c0_21, %c1_22, %c0_23, %c0_24] : memref<1x4x8x8xbf16, #tpu.memory_space<vmem>>, vector<1x1x8x8xbf16>
    %27 = vector.shape_cast %26 : vector<1x1x8x8xbf16> to vector<8x8xbf16>
    %c0_25 = arith.constant 0 : index
    %c1_26 = arith.constant 1 : index
    %c0_27 = arith.constant 0 : index
    %c0_28 = arith.constant 0 : index
    %28 = vector.load %arg5[%c0_25, %c1_26, %c0_27, %c0_28] : memref<1x4x8x8xbf16, #tpu.memory_space<vmem>>, vector<1x1x8x8xbf16>
    %29 = vector.shape_cast %28 : vector<1x1x8x8xbf16> to vector<8x8xbf16>
    %cst_29 = arith.constant dense<0.000000e+00> : vector<8x8xf32>
    %30 = tpu.matmul %25, %27, %cst_29 {dimension_numbers = #tpu.dot_dimension_numbers<[1], [1], [0], [0], [0, 0, 1, 0], [], []>} : vector<8x8xbf16>, vector<8x8xbf16>, vector<8x8xf32> -> vector<8x8xf32>
    %cst_30 = arith.constant dense<0xFF800000> : vector<8xf32>
    %31 = vector.multi_reduction <maximumf>, %30, %cst_30 [1] : vector<8x8xf32> to vector<8xf32>
    %32 = vector.shape_cast %31 : vector<8xf32> to vector<8x1xf32>
    %33 = vector.broadcast %32 : vector<8x1xf32> to vector<8x8xf32>
    %34 = arith.subf %30, %33 : vector<8x8xf32>
    %35 = math.exp %34 : vector<8x8xf32>
    %cst_31 = arith.constant dense<0.000000e+00> : vector<8xf32>
    %36 = vector.multi_reduction <add>, %35, %cst_31 [1] : vector<8x8xf32> to vector<8xf32>
    %37 = vector.shape_cast %36 : vector<8xf32> to vector<8x1xf32>
    %38 = tpu.reciprocal %37 {approx = true} : vector<8x1xf32> -> vector<8x1xf32>
    %39 = vector.broadcast %38 : vector<8x1xf32> to vector<8x8xf32>
    %40 = arith.mulf %35, %39 : vector<8x8xf32>
    %41 = arith.truncf %40 : vector<8x8xf32> to vector<8x8xbf16>
    %c0_32 = arith.constant 0 : index
    %c1_33 = arith.constant 1 : index
    %c0_34 = arith.constant 0 : index
    %c0_35 = arith.constant 0 : index
    %42 = vector.load %arg9[%c0_32, %c1_33, %c0_34, %c0_35] : memref<1x4x8x8xbf16, #tpu.memory_space<vmem>>, vector<1x1x8x8xbf16>
    %43 = vector.shape_cast %42 : vector<1x1x8x8xbf16> to vector<8x8xbf16>
    %44 = vector.shape_cast %41 : vector<8x8xbf16> to vector<1x1x8x8xbf16>
    tpu.vector_store %arg9[%c0_32, %c1_33, %c0_34, %c0_35], %44 {strides = array<i32>} : memref<1x4x8x8xbf16, #tpu.memory_space<vmem>>, vector<1x1x8x8xbf16>,
    %45 = arith.truncf %40 : vector<8x8xf32> to vector<8x8xbf16>
    %cst_36 = arith.constant dense<0.000000e+00> : vector<8x8xf32>
    %46 = tpu.matmul %45, %29, %cst_36 {dimension_numbers = #tpu.dot_dimension_numbers<[1], [0], [0], [1], [0, 0, 1, 1], [], []>} : vector<8x8xbf16>, vector<8x8xbf16>, vector<8x8xf32> -> vector<8x8xf32>
    %47 = arith.truncf %46 : vector<8x8xf32> to vector<8x8xbf16>
    %c0_37 = arith.constant 0 : index
    %c2 = arith.constant 2 : index
    %c0_38 = arith.constant 0 : index
    %c0_39 = arith.constant 0 : index
    %48 = vector.load %arg3[%c0_37, %c2, %c0_38, %c0_39] : memref<1x4x8x8xbf16, #tpu.memory_space<vmem>>, vector<1x1x8x8xbf16>
    %49 = vector.shape_cast %48 : vector<1x1x8x8xbf16> to vector<8x8xbf16>
    %c0_40 = arith.constant 0 : index
    %c2_41 = arith.constant 2 : index
    %c0_42 = arith.constant 0 : index
    %c0_43 = arith.constant 0 : index
    %50 = vector.load %arg4[%c0_40, %c2_41, %c0_42, %c0_43] : memref<1x4x8x8xbf16, #tpu.memory_space<vmem>>, vector<1x1x8x8xbf16>
    %51 = vector.shape_cast %50 : vector<1x1x8x8xbf16> to vector<8x8xbf16>
    %c0_44 = arith.constant 0 : index
    %c2_45 = arith.constant 2 : index
    %c0_46 = arith.constant 0 : index
    %c0_47 = arith.constant 0 : index
    %52 = vector.load %arg5[%c0_44, %c2_45, %c0_46, %c0_47] : memref<1x4x8x8xbf16, #tpu.memory_space<vmem>>, vector<1x1x8x8xbf16>
    %53 = vector.shape_cast %52 : vector<1x1x8x8xbf16> to vector<8x8xbf16>
    %cst_48 = arith.constant dense<0.000000e+00> : vector<8x8xf32>
    %54 = tpu.matmul %49, %51, %cst_48 {dimension_numbers = #tpu.dot_dimension_numbers<[1], [1], [0], [0], [0, 0, 1, 0], [], []>} : vector<8x8xbf16>, vector<8x8xbf16>, vector<8x8xf32> -> vector<8x8xf32>
    %cst_49 = arith.constant dense<0xFF800000> : vector<8xf32>
    %55 = vector.multi_reduction <maximumf>, %54, %cst_49 [1] : vector<8x8xf32> to vector<8xf32>
    %56 = vector.shape_cast %55 : vector<8xf32> to vector<8x1xf32>
    %57 = vector.broadcast %56 : vector<8x1xf32> to vector<8x8xf32>
    %58 = arith.subf %54, %57 : vector<8x8xf32>
    %59 = math.exp %58 : vector<8x8xf32>
    %cst_50 = arith.constant dense<0.000000e+00> : vector<8xf32>
    %60 = vector.multi_reduction <add>, %59, %cst_50 [1] : vector<8x8xf32> to vector<8xf32>
    %61 = vector.shape_cast %60 : vector<8xf32> to vector<8x1xf32>
    %62 = tpu.reciprocal %61 {approx = true} : vector<8x1xf32> -> vector<8x1xf32>
    %63 = vector.broadcast %62 : vector<8x1xf32> to vector<8x8xf32>
    %64 = arith.mulf %59, %63 : vector<8x8xf32>
    %65 = arith.truncf %64 : vector<8x8xf32> to vector<8x8xbf16>
    %c0_51 = arith.constant 0 : index
    %c2_52 = arith.constant 2 : index
    %c0_53 = arith.constant 0 : index
    %c0_54 = arith.constant 0 : index
    %66 = vector.load %arg9[%c0_51, %c2_52, %c0_53, %c0_54] : memref<1x4x8x8xbf16, #tpu.memory_space<vmem>>, vector<1x1x8x8xbf16>
    %67 = vector.shape_cast %66 : vector<1x1x8x8xbf16> to vector<8x8xbf16>
    %68 = vector.shape_cast %65 : vector<8x8xbf16> to vector<1x1x8x8xbf16>
    tpu.vector_store %arg9[%c0_51, %c2_52, %c0_53, %c0_54], %68 {strides = array<i32>} : memref<1x4x8x8xbf16, #tpu.memory_space<vmem>>, vector<1x1x8x8xbf16>,
    %69 = arith.truncf %64 : vector<8x8xf32> to vector<8x8xbf16>
    %cst_55 = arith.constant dense<0.000000e+00> : vector<8x8xf32>
    %70 = tpu.matmul %69, %53, %cst_55 {dimension_numbers = #tpu.dot_dimension_numbers<[1], [0], [0], [1], [0, 0, 1, 1], [], []>} : vector<8x8xbf16>, vector<8x8xbf16>, vector<8x8xf32> -> vector<8x8xf32>
    %71 = arith.truncf %70 : vector<8x8xf32> to vector<8x8xbf16>
    %c0_56 = arith.constant 0 : index
    %c3 = arith.constant 3 : index
    %c0_57 = arith.constant 0 : index
    %c0_58 = arith.constant 0 : index
    %72 = vector.load %arg3[%c0_56, %c3, %c0_57, %c0_58] : memref<1x4x8x8xbf16, #tpu.memory_space<vmem>>, vector<1x1x8x8xbf16>
    %73 = vector.shape_cast %72 : vector<1x1x8x8xbf16> to vector<8x8xbf16>
    %c0_59 = arith.constant 0 : index
    %c3_60 = arith.constant 3 : index
    %c0_61 = arith.constant 0 : index
    %c0_62 = arith.constant 0 : index
    %74 = vector.load %arg4[%c0_59, %c3_60, %c0_61, %c0_62] : memref<1x4x8x8xbf16, #tpu.memory_space<vmem>>, vector<1x1x8x8xbf16>
    %75 = vector.shape_cast %74 : vector<1x1x8x8xbf16> to vector<8x8xbf16>
    %c0_63 = arith.constant 0 : index
    %c3_64 = arith.constant 3 : index
    %c0_65 = arith.constant 0 : index
    %c0_66 = arith.constant 0 : index
    %76 = vector.load %arg5[%c0_63, %c3_64, %c0_65, %c0_66] : memref<1x4x8x8xbf16, #tpu.memory_space<vmem>>, vector<1x1x8x8xbf16>
    %77 = vector.shape_cast %76 : vector<1x1x8x8xbf16> to vector<8x8xbf16>
    %cst_67 = arith.constant dense<0.000000e+00> : vector<8x8xf32>
    %78 = tpu.matmul %73, %75, %cst_67 {dimension_numbers = #tpu.dot_dimension_numbers<[1], [1], [0], [0], [0, 0, 1, 0], [], []>} : vector<8x8xbf16>, vector<8x8xbf16>, vector<8x8xf32> -> vector<8x8xf32>
    %cst_68 = arith.constant dense<0xFF800000> : vector<8xf32>
    %79 = vector.multi_reduction <maximumf>, %78, %cst_68 [1] : vector<8x8xf32> to vector<8xf32>
    %80 = vector.shape_cast %79 : vector<8xf32> to vector<8x1xf32>
    %81 = vector.broadcast %80 : vector<8x1xf32> to vector<8x8xf32>
    %82 = arith.subf %78, %81 : vector<8x8xf32>
    %83 = math.exp %82 : vector<8x8xf32>
    %cst_69 = arith.constant dense<0.000000e+00> : vector<8xf32>
    %84 = vector.multi_reduction <add>, %83, %cst_69 [1] : vector<8x8xf32> to vector<8xf32>
    %85 = vector.shape_cast %84 : vector<8xf32> to vector<8x1xf32>
    %86 = tpu.reciprocal %85 {approx = true} : vector<8x1xf32> -> vector<8x1xf32>
    %87 = vector.broadcast %86 : vector<8x1xf32> to vector<8x8xf32>
    %88 = arith.mulf %83, %87 : vector<8x8xf32>
    %89 = arith.truncf %88 : vector<8x8xf32> to vector<8x8xbf16>
    %c0_70 = arith.constant 0 : index
    %c3_71 = arith.constant 3 : index
    %c0_72 = arith.constant 0 : index
    %c0_73 = arith.constant 0 : index
    %90 = vector.load %arg9[%c0_70, %c3_71, %c0_72, %c0_73] : memref<1x4x8x8xbf16, #tpu.memory_space<vmem>>, vector<1x1x8x8xbf16>
    %91 = vector.shape_cast %90 : vector<1x1x8x8xbf16> to vector<8x8xbf16>
    %92 = vector.shape_cast %89 : vector<8x8xbf16> to vector<1x1x8x8xbf16>
    tpu.vector_store %arg9[%c0_70, %c3_71, %c0_72, %c0_73], %92 {strides = array<i32>} : memref<1x4x8x8xbf16, #tpu.memory_space<vmem>>, vector<1x1x8x8xbf16>,
    %93 = arith.truncf %88 : vector<8x8xf32> to vector<8x8xbf16>
    %cst_74 = arith.constant dense<0.000000e+00> : vector<8x8xf32>
    %94 = tpu.matmul %93, %77, %cst_74 {dimension_numbers = #tpu.dot_dimension_numbers<[1], [0], [0], [1], [0, 0, 1, 1], [], []>} : vector<8x8xbf16>, vector<8x8xbf16>, vector<8x8xf32> -> vector<8x8xf32>
    %95 = arith.truncf %94 : vector<8x8xf32> to vector<8x8xbf16>
    %96 = tpu.concatenate %23, %47, %71, %95 in 1 : vector<8x8xbf16>, vector<8x8xbf16>, vector<8x8xbf16>, vector<8x8xbf16> -> vector<8x32xbf16>
    %c0_75 = arith.constant 0 : index
    %c0_76 = arith.constant 0 : index
    %97 = vector.load %arg6[%c0_75, %c0_76] : memref<32x32xbf16, #tpu.memory_space<vmem>>, vector<32x32xbf16>
    %cst_77 = arith.constant dense<0.000000e+00> : vector<8x32xf32>
    %98 = tpu.matmul %96, %97, %cst_77 {dimension_numbers = #tpu.dot_dimension_numbers<[1], [0], [0], [1], [0, 0, 1, 1], [], []>} : vector<8x32xbf16>, vector<32x32xbf16>, vector<8x32xf32> -> vector<8x32xf32>
    %c0_i32 = arith.constant 0 : i32
    %99 = arith.cmpi eq, %arg2, %c0_i32 : i32
    %100 = arith.extui %99 : i1 to i32
    %c0_i32_78 = arith.constant 0 : i32
    %101 = arith.cmpi ne, %100, %c0_i32_78 : i32
    scf.if %101 {
      %c0_85 = arith.constant 0 : index
      %c0_86 = arith.constant 0 : index
      %108 = vector.load %arg7[%c0_85, %c0_86] : memref<1x32xf32, #tpu.memory_space<vmem>>, vector<1x32xf32>
      %109 = vector.shape_cast %108 : vector<1x32xf32> to vector<1x32xf32>
      %110 = vector.broadcast %109 : vector<1x32xf32> to vector<8x32xf32>
      %c0_87 = arith.constant 0 : index
      %c0_88 = arith.constant 0 : index
      %111 = vector.load %arg10[%c0_87, %c0_88] : memref<8x32xf32, #tpu.memory_space<vmem>>, vector<8x32xf32>
      tpu.vector_store %arg10[%c0_87, %c0_88], %110 {strides = array<i32>} : memref<8x32xf32, #tpu.memory_space<vmem>>, vector<8x32xf32>,
    } else {
    }
    %c0_79 = arith.constant 0 : index
    %c0_80 = arith.constant 0 : index
    %102 = vector.load %arg10[%c0_79, %c0_80] : memref<8x32xf32, #tpu.memory_space<vmem>>, vector<8x32xf32>
    %103 = arith.addf %102, %98 : vector<8x32xf32>
    %c0_81 = arith.constant 0 : index
    %c0_82 = arith.constant 0 : index
    %104 = vector.load %arg10[%c0_81, %c0_82] : memref<8x32xf32, #tpu.memory_space<vmem>>, vector<8x32xf32>
    tpu.vector_store %arg10[%c0_81, %c0_82], %103 {strides = array<i32>} : memref<8x32xf32, #tpu.memory_space<vmem>>, vector<8x32xf32>,
    %c0_i32_83 = arith.constant 0 : i32
    %105 = arith.cmpi eq, %arg2, %c0_i32_83 : i32
    %106 = arith.extui %105 : i1 to i32
    %c0_i32_84 = arith.constant 0 : i32
    %107 = arith.cmpi ne, %106, %c0_i32_84 : i32
    scf.if %107 {
      %c0_85 = arith.constant 0 : index
      %c0_86 = arith.constant 0 : index
      %108 = vector.load %arg10[%c0_85, %c0_86] : memref<8x32xf32, #tpu.memory_space<vmem>>, vector<8x32xf32>
      %c0_87 = arith.constant 0 : index
      %c0_88 = arith.constant 0 : index
      %c0_89 = arith.constant 0 : index
      %109 = vector.load %arg8[%c0_87, %c0_88, %c0_89] : memref<1x8x32xf32, #tpu.memory_space<vmem>>, vector<1x8x32xf32>
      %110 = vector.shape_cast %109 : vector<1x8x32xf32> to vector<8x32xf32>
      %111 = vector.shape_cast %108 : vector<8x32xf32> to vector<1x8x32xf32>
      tpu.vector_store %arg8[%c0_87, %c0_88, %c0_89], %111 {strides = array<i32>} : memref<1x8x32xf32, #tpu.memory_space<vmem>>, vector<1x8x32xf32>,
    } else {
    }
    return
  }
  func.func @transform_0(%arg0: i32, %arg1: i32, %arg2: i32) -> (i32, i32, i32, i32) {
    %c0_i32 = arith.constant 0 : i32
    %c0_i32_0 = arith.constant 0 : i32
    return %arg0, %arg2, %arg1, %c0_i32 : i32, i32, i32, i32
  }
  func.func @transform_1(%arg0: i32, %arg1: i32, %arg2: i32) -> (i32, i32, i32, i32) {
    %c0_i32 = arith.constant 0 : i32
    %c0_i32_0 = arith.constant 0 : i32
    %c0_i32_1 = arith.constant 0 : i32
    return %arg0, %arg2, %c0_i32, %c0_i32_0 : i32, i32, i32, i32
  }
  func.func @transform_2(%arg0: i32, %arg1: i32, %arg2: i32) -> (i32, i32, i32, i32) {
    %c0_i32 = arith.constant 0 : i32
    %c0_i32_0 = arith.constant 0 : i32
    %c0_i32_1 = arith.constant 0 : i32
    return %arg0, %arg2, %c0_i32, %c0_i32_0 : i32, i32, i32, i32
  }
  func.func @transform_3(%arg0: i32, %arg1: i32, %arg2: i32) -> (i32, i32) {
    %c0_i32 = arith.constant 0 : i32
    %c0_i32_0 = arith.constant 0 : i32
    %c0_i32_1 = arith.constant 0 : i32
    return %c0_i32, %c0_i32_0 : i32, i32
  }
  func.func @transform_4(%arg0: i32, %arg1: i32, %arg2: i32) -> (i32, i32) {
    %c0_i32 = arith.constant 0 : i32
    %c0_i32_0 = arith.constant 0 : i32
    %c0_i32_1 = arith.constant 0 : i32
    return %c0_i32, %c0_i32_0 : i32, i32
  }
  func.func @transform_5(%arg0: i32, %arg1: i32, %arg2: i32) -> (i32, i32, i32) {
    %c0_i32 = arith.constant 0 : i32
    %c0_i32_0 = arith.constant 0 : i32
    return %arg0, %arg1, %c0_i32 : i32, i32, i32
  }
  func.func @transform_6(%arg0: i32, %arg1: i32, %arg2: i32) -> (i32, i32, i32, i32) {
    %c0_i32 = arith.constant 0 : i32
    %c0_i32_0 = arith.constant 0 : i32
    return %arg0, %arg2, %arg1, %c0_i32 : i32, i32, i32, i32
  }
}

</mosaic_0001>

<llo_original>
// kernel: tpu_custom_call.1
$region0: #{tpu_custom_call.1}
  #allocation0 [shape = 'u32[]', space=smem, size = 0x4, offset = 0x4, fixed_abs, tag = 'smem constant byte address 0x4 - core index']
  #allocation1 [shape = 'u32[144,128]{1,0:T(1,128)}', space=vmem, size = 0x12000, scoped, tag = 'internal scratch']
  #allocation2 [shape = 'f32[8,32]{1,0:T(8,128)}', space=vmem, size = 0x1000, scoped, tag = 'scratch operand']
  %s0 = inlined_call_operand.hbm [shape: bf16[2,4,8,8], index: 0, kind: input, shape index: {}]
  %s1 = inlined_call_operand.hbm [shape: bf16[2,4,8,8], index: 1, kind: input, shape index: {}]
  %s2 = inlined_call_operand.hbm [shape: bf16[2,4,8,8], index: 2, kind: input, shape index: {}]
  %s3 = inlined_call_operand.hbm [shape: bf16[32,32], index: 3, kind: input, shape index: {}]
  %s4 = inlined_call_operand.vmem [shape: f32[1,32], index: 4, kind: input, shape index: {}]
  %s5 = inlined_call_operand.hbm [shape: f32[2,8,32], index: 5, kind: output, shape index: {0}]
  %s6 = inlined_call_operand.hbm [shape: bf16[2,4,8,8], index: 6, kind: output, shape index: {1}]
  %7 = xla_tuple %s5, %s6
  %s8 = sld [smem:[#allocation0]]
  $region85: #{tpu_custom_call.1} parent=0
    _
  %s10 = ssub.s32 1, %s8
  %s11 = scalar_select 0, %s10, %s8
  $region1: #{tpu_custom_call.1} parent=0
    #allocation3 [shape = 'u8[16384]{0}', space=vmem, size = 0x4000, scoped, tag = 'input window, operand 0']
    #allocation4 [shape = 's32[2]{0}', space=sflag, size = 0x8, scoped, tag = 'scoped memory for tpu_custom_call.1']
    #allocation5 [shape = 's32[2]{0}', space=sflag, size = 0x8, scoped, tag = 'scoped memory for tpu_custom_call.1']
    #allocation6 [shape = 'u8[16384]{0}', space=vmem, size = 0x4000, scoped, tag = 'input window, operand 1']
    #allocation7 [shape = 's32[2]{0}', space=sflag, size = 0x8, scoped, tag = 'scoped memory for tpu_custom_call.1']
    #allocation8 [shape = 'u8[16384]{0}', space=vmem, size = 0x4000, scoped, tag = 'input window, operand 2']
    #allocation9 [shape = 'u8[8192]{0}', space=vmem, size = 0x2000, scoped, tag = 'input window, operand 3, single buffered']
    #allocation10 [shape = 's32[1]{0}', space=sflag, size = 0x4, scoped, tag = 'scoped memory for tpu_custom_call.1']
    #allocation11 [shape = 'u8[8192]{0}', space=vmem, size = 0x2000, scoped, tag = 'output window, operand 0']
    #allocation12 [shape = 'u8[16384]{0}', space=vmem, size = 0x4000, scoped, tag = 'output window, operand 1']
    #allocation13 [shape = 's32[2]{0}', space=sflag, size = 0x8, scoped, tag = 'scoped memory for tpu_custom_call.1']
    %12 = vsyncpa [#allocation4], 0
    %s13 = scalar_lea.sflag [#allocation4], 1
    %14 = vsyncpa %s13, 0
    %15 = vsyncpa [#allocation7], 0
    %s16 = scalar_lea.sflag [#allocation7], 1
    %17 = vsyncpa %s16, 0
    %18 = vsyncpa [#allocation10], 0
    %19 = vsyncpa [#allocation5], 0
    %s20 = scalar_lea.sflag [#allocation5], 1
    %21 = vsyncpa %s20, 0
    %22 = vsyncpa [#allocation13], 0
    %s23 = scalar_lea.sflag [#allocation13], 1
    %24 = vsyncpa %s23, 0
    loop: start=0, step=1, limit=4
    $region2: #{tpu_custom_call.1} parent=1 // loop_pre_header
      _
    $region3: #{tpu_custom_call.1} parent=1 // loop_header
      %s26 = sphi 0, %s30
      %p27 = scmp.ge.s32.totalorder %s26, 4
      %s33 = sphi 0, %s52
      %s34 = sphi 0, %s48
      %s35 = sphi 0, %s44
      %s36 = sphi 0, %s33
      %s37 = sphi 0, %s34
      %s38 = sphi 0, %s35
      %s39 = sphi 0, %s36
      %s40 = sphi 0, %s37
      %s41 = sphi 0, %s38
      %s59 = sphi 0, %s61
      %s62 = sphi 0, %s59
      %s63 = sphi 0, %s62
      %s79 = sphi 0, %s63
      %s87 = sphi 0, %s89
      %s90 = sphi 0, %s87
      %s91 = sphi 0, %s90
      %s107 = sphi 0, %s91
      %s115 = sphi 0, %s117
      %s118 = sphi 0, %s115
      %s119 = sphi 0, %s118
      %s135 = sphi 0, %s119
      %s139 = sphi 0, %s139
      %s141 = sphi 0, %s139
      %s142 = sphi 0, %s141
      %s156 = sphi 0, %s142
      %s160 = sphi 0, %s160
      %s162 = sphi 0, %s160
      %s163 = sphi 0, %s162
      %s177 = sphi 0, %s163
      %s185 = sphi 0, %s187
      %s188 = sphi 0, %s185
      %s189 = sphi 0, %s188
      %s205 = sphi 0, %s189
      %s215 = sphi 0, %s217
      %s218 = sphi 0, %s215
      %s219 = sphi 0, %s218
      %s235 = sphi 0, %s219
    $region4: #{tpu_custom_call.1} parent=1 // loop_header_branch
      %29 = sbr.rel (%p27) target = $region8
    $region5: #{tpu_custom_call.1} parent=1 // loop_body
      %s31 = ssub.s32 %s26, 1
      %s32 = ssub.s32 %s26, 2
      %s42 = sadd.s32 1, %s35
      %p43 = scmp.ge.s32.totalorder %s42, 1
      %s44 = scalar_select %p43, 0, %s42
      %s45 = sadd.s32 1, %s34
      %s46 = scalar_select %p43, %s45, %s34
      %p47 = scmp.ge.s32.totalorder %s46, 1
      %s48 = scalar_select %p47, 0, %s46
      %s49 = sadd.s32 1, %s33
      %s50 = scalar_select %p47, %s49, %s33
      %p51 = scmp.ge.s32.totalorder %s50, 2
      %s52 = scalar_select %p51, 0, %s50
      %s53 = ssub.s32 %s33, %s52
      %s54 = ssub.s32 %s35, %s44
      %s55 = sor.u32 %s53, %s54
      %s56 = ssub.s32 %s34, %s48
      %s57 = sor.u32 %s55, %s56
      %p58 = scmp.eq.s32.totalorder %s57, 0
      %s60 = sadd.s32 %s59, 1
      %s61 = scalar_select %p58, %s59, %s60
      %p64 = pneg %p58
      %p65 = scmp.eq.s32.totalorder %s26, 1
      %p66 = por %p64, %p65
      %p67 = scmp.ne.s32.totalorder %s59, %s62
      %p68 = scmp.eq.s32.totalorder %s26, 0
      %p69 = por %p67, %p68
      %p70 = scmp.ne.s32.totalorder %s59, %s62
      %p71 = scmp.eq.s32.totalorder %s31, 1
      %p72 = por %p70, %p71
      %p73 = scmp.ne.s32.totalorder %s62, %s63
      %p74 = scmp.eq.s32.totalorder %s31, 0
      %p75 = por %p73, %p74
      %p76 = scmp.ne.s32.totalorder %s62, %s63
      %p77 = scmp.eq.s32.totalorder %s32, 1
      %p78 = por %p76, %p77
      %p80 = scmp.ne.s32.totalorder %s63, %s79
      %p81 = scmp.eq.s32.totalorder %s32, 0
      %p82 = por %p80, %p81
      %s83 = ssub.s32 %s33, %s52
      %s84 = ssub.s32 %s35, %s44
      %s85 = sor.u32 %s83, %s84
      %p86 = scmp.eq.s32.totalorder %s85, 0
      %s88 = sadd.s32 %s87, 1
      %s89 = scalar_select %p86, %s87, %s88
      %p92 = pneg %p86
      %p93 = scmp.eq.s32.totalorder %s26, 1
      %p94 = por %p92, %p93
      %p95 = scmp.ne.s32.totalorder %s87, %s90
      %p96 = scmp.eq.s32.totalorder %s26, 0
      %p97 = por %p95, %p96
      %p98 = scmp.ne.s32.totalorder %s87, %s90
      %p99 = scmp.eq.s32.totalorder %s31, 1
      %p100 = por %p98, %p99
      %p101 = scmp.ne.s32.totalorder %s90, %s91
      %p102 = scmp.eq.s32.totalorder %s31, 0
      %p103 = por %p101, %p102
      %p104 = scmp.ne.s32.totalorder %s90, %s91
      %p105 = scmp.eq.s32.totalorder %s32, 1
      %p106 = por %p104, %p105
      %p108 = scmp.ne.s32.totalorder %s91, %s107
      %p109 = scmp.eq.s32.totalorder %s32, 0
      %p110 = por %p108, %p109
      %s111 = ssub.s32 %s33, %s52
      %s112 = ssub.s32 %s35, %s44
      %s113 = sor.u32 %s111, %s112
      %p114 = scmp.eq.s32.totalorder %s113, 0
      %s116 = sadd.s32 %s115, 1
      %s117 = scalar_select %p114, %s115, %s116
      %p120 = pneg %p114
      %p121 = scmp.eq.s32.totalorder %s26, 1
      %p122 = por %p120, %p121
      %p123 = scmp.ne.s32.totalorder %s115, %s118
      %p124 = scmp.eq.s32.totalorder %s26, 0
      %p125 = por %p123, %p124
      %p126 = scmp.ne.s32.totalorder %s115, %s118
      %p127 = scmp.eq.s32.totalorder %s31, 1
      %p128 = por %p126, %p127
      %p129 = scmp.ne.s32.totalorder %s118, %s119
      %p130 = scmp.eq.s32.totalorder %s31, 0
      %p131 = por %p129, %p130
      %p132 = scmp.ne.s32.totalorder %s118, %s119
      %p133 = scmp.eq.s32.totalorder %s32, 1
      %p134 = por %p132, %p133
      %p136 = scmp.ne.s32.totalorder %s119, %s135
      %p137 = scmp.eq.s32.totalorder %s32, 0
      %p138 = por %p136, %p137
      %s140 = sadd.s32 %s139, 1
      %p143 = scmp.eq.s32.totalorder %s26, 1
      %p144 = scmp.ne.s32.totalorder %s139, %s141
      %p145 = scmp.eq.s32.totalorder %s26, 0
      %p146 = por %p144, %p145
      %p147 = scmp.ne.s32.totalorder %s139, %s141
      %p148 = scmp.eq.s32.totalorder %s31, 1
      %p149 = por %p147, %p148
      %p150 = scmp.ne.s32.totalorder %s141, %s142
      %p151 = scmp.eq.s32.totalorder %s31, 0
      %p152 = por %p150, %p151
      %p153 = scmp.ne.s32.totalorder %s141, %s142
      %p154 = scmp.eq.s32.totalorder %s32, 1
      %p155 = por %p153, %p154
      %p157 = scmp.ne.s32.totalorder %s142, %s156
      %p158 = scmp.eq.s32.totalorder %s32, 0
      %p159 = por %p157, %p158
      %s161 = sadd.s32 %s160, 1
      %p164 = scmp.eq.s32.totalorder %s26, 1
      %p165 = scmp.ne.s32.totalorder %s160, %s162
      %p166 = scmp.eq.s32.totalorder %s26, 0
      %p167 = por %p165, %p166
      %p168 = scmp.ne.s32.totalorder %s160, %s162
      %p169 = scmp.eq.s32.totalorder %s31, 1
      %p170 = por %p168, %p169
      %p171 = scmp.ne.s32.totalorder %s162, %s163
      %p172 = scmp.eq.s32.totalorder %s31, 0
      %p173 = por %p171, %p172
      %p174 = scmp.ne.s32.totalorder %s162, %s163
      %p175 = scmp.eq.s32.totalorder %s32, 1
      %p176 = por %p174, %p175
      %p178 = scmp.ne.s32.totalorder %s163, %s177
      %p179 = scmp.eq.s32.totalorder %s32, 0
      %p180 = por %p178, %p179
      %s181 = ssub.s32 %s33, %s52
      %s182 = ssub.s32 %s34, %s48
      %s183 = sor.u32 %s181, %s182
      %p184 = scmp.eq.s32.totalorder %s183, 0
      %s186 = sadd.s32 %s185, 1
      %s187 = scalar_select %p184, %s185, %s186
      %p190 = pneg %p184
      %p191 = scmp.eq.s32.totalorder %s26, 1
      %p192 = por %p190, %p191
      %p193 = scmp.ne.s32.totalorder %s185, %s188
      %p194 = scmp.eq.s32.totalorder %s26, 0
      %p195 = por %p193, %p194
      %p196 = scmp.ne.s32.totalorder %s185, %s188
      %p197 = scmp.eq.s32.totalorder %s31, 1
      %p198 = por %p196, %p197
      %p199 = scmp.ne.s32.totalorder %s188, %s189
      %p200 = scmp.eq.s32.totalorder %s31, 0
      %p201 = por %p199, %p200
      %p202 = scmp.ne.s32.totalorder %s188, %s189
      %p203 = scmp.eq.s32.totalorder %s32, 1
      %p204 = por %p202, %p203
      %p206 = scmp.ne.s32.totalorder %s189, %s205
      %p207 = scmp.eq.s32.totalorder %s32, 0
      %p208 = por %p206, %p207
      %s209 = ssub.s32 %s33, %s52
      %s210 = ssub.s32 %s35, %s44
      %s211 = sor.u32 %s209, %s210
      %s212 = ssub.s32 %s34, %s48
      %s213 = sor.u32 %s211, %s212
      %p214 = scmp.eq.s32.totalorder %s213, 0
      %s216 = sadd.s32 %s215, 1
      %s217 = scalar_select %p214, %s215, %s216
      %p220 = pneg %p214
      %p221 = scmp.eq.s32.totalorder %s26, 1
      %p222 = por %p220, %p221
      %p223 = scmp.ne.s32.totalorder %s215, %s218
      %p224 = scmp.eq.s32.totalorder %s26, 0
      %p225 = por %p223, %p224
      %p226 = scmp.ne.s32.totalorder %s215, %s218
      %p227 = scmp.eq.s32.totalorder %s31, 1
      %p228 = por %p226, %p227
      %p229 = scmp.ne.s32.totalorder %s218, %s219
      %p230 = scmp.eq.s32.totalorder %s31, 0
      %p231 = por %p229, %p230
      %p232 = scmp.ne.s32.totalorder %s218, %s219
      %p233 = scmp.eq.s32.totalorder %s32, 1
      %p234 = por %p232, %p233
      %p236 = scmp.ne.s32.totalorder %s219, %s235
      %p237 = scmp.eq.s32.totalorder %s32, 0
      %p238 = por %p236, %p237
      %p239 = scmp.le.s32.totalorder 1, %s26
      %p240 = scmp.lt.s32.totalorder %s26, 3
      %p241 = pnand %p239, %p240
      %p242 = pneg %p241
      // Predicated region
      $region9: #{tpu_custom_call.1} parent=5 // pred_check
        _
      $region10: #{tpu_custom_call.1} parent=5 // pred_check_branch
        %244 = sbr.rel (%p241) target = $region12
      $region11: #{tpu_custom_call.1} parent=5 // pred_region
        %s245 = ssub.s32 %s26, 1
        // Predicated region
        $region13: #{tpu_custom_call.1} parent=11 // pred_check
          %p246 = pneg %p152
        $region14: #{tpu_custom_call.1} parent=11 // pred_check_branch
          %248 = sbr.rel (%p246) target = $region16
        $region15: #{tpu_custom_call.1} parent=11 // pred_region
          %s250 = ssub.s32 256, 256
          %251 = vsyncadd [#allocation10], %s250
          %s252 = sshll.u32 [#allocation9], 4
          %s253 = int_to_ptr.vmem [resolvable:$true] %s252
          %258 = dma.hbm_to_vmem [thread:$0]  %s3, 256, %s253, [#allocation10], 64, 64, 4
        $region16: #{tpu_custom_call.1} parent=11 // pred_fallthru
          _
        // Predicated region
        $region17: #{tpu_custom_call.1} parent=11 // pred_check
          %p259 = pneg %p173
        $region18: #{tpu_custom_call.1} parent=11 // pred_check_branch
          %261 = sbr.rel (%p259) target = $region20
        $region19: #{tpu_custom_call.1} parent=11 // pred_region
          _
        $region20: #{tpu_custom_call.1} parent=11 // pred_fallthru
          _
      $region12: #{tpu_custom_call.1} parent=5 // pred_fallthru
        _
      %p262 = scmp.lt.s32.totalorder %s26, 2
      // Predicated region
      $region21: #{tpu_custom_call.1} parent=5 // pred_check
        %p263 = pneg %p262
      $region22: #{tpu_custom_call.1} parent=5 // pred_check_branch
        %265 = sbr.rel (%p263) target = $region24
      $region23: #{tpu_custom_call.1} parent=5 // pred_region
        // Predicated region
        $region25: #{tpu_custom_call.1} parent=23 // pred_check
          %p266 = pneg %p69
        $region26: #{tpu_custom_call.1} parent=23 // pred_check_branch
          %268 = sbr.rel (%p266) target = $region28
        $region27: #{tpu_custom_call.1} parent=23 // pred_region
          %s269 = sand.u32 %s59, 1
          %s270 = scalar_lea.sflag [#allocation4], %s269
          %s271 = sand.u32 %s59, 1
          %s272 = smul.addr %s271, 16
          %s273 = scalar_lea.vmem [#allocation3], %s272
          %s274 = smul.u32 4, %s35
          %s276 = ssub.s32 256, 256
          %277 = vsyncadd %s270, %s276
          %s278 = sadd.s32 %s34, %s274
          %s279 = smul.addr %s33, 4
          %s280 = sadd.s32 %s278, %s279
          %s281 = smul.addr %s280, 64
          %s282 = scalar_lea.hbm %s0, %s281
          %s283 = sshll.u32 %s273, 4
          %s284 = int_to_ptr.vmem [resolvable:$true] %s283
          %289 = dma.hbm_to_vmem [thread:$0]  %s282, 256, %s284, %s270, 64, 64, 4
        $region28: #{tpu_custom_call.1} parent=23 // pred_fallthru
          _
        // Predicated region
        $region29: #{tpu_custom_call.1} parent=23 // pred_check
          %p290 = pneg %p97
        $region30: #{tpu_custom_call.1} parent=23 // pred_check_branch
          %292 = sbr.rel (%p290) target = $region32
        $region31: #{tpu_custom_call.1} parent=23 // pred_region
          %s293 = sand.u32 %s26, 1
          %s294 = scalar_lea.sflag [#allocation7], %s293
          %s295 = sand.u32 %s87, 1
          %s296 = smul.addr %s295, 16
          %s297 = scalar_lea.vmem [#allocation6], %s296
          %s298 = smul.u32 4, %s35
          %s300 = ssub.s32 256, 256
          %301 = vsyncadd %s294, %s300
          %s302 = smul.addr %s33, 4
          %s303 = sadd.s32 %s298, %s302
          %s304 = smul.addr %s303, 64
          %s305 = scalar_lea.hbm %s1, %s304
          %s306 = sshll.u32 %s297, 4
          %s307 = int_to_ptr.vmem [resolvable:$true] %s306
          %312 = dma.hbm_to_vmem [thread:$0]  %s305, 256, %s307, %s294, 64, 64, 4
        $region32: #{tpu_custom_call.1} parent=23 // pred_fallthru
          _
        // Predicated region
        $region33: #{tpu_custom_call.1} parent=23 // pred_check
          %p313 = pneg %p125
        $region34: #{tpu_custom_call.1} parent=23 // pred_check_branch
          %315 = sbr.rel (%p313) target = $region36
        $region35: #{tpu_custom_call.1} parent=23 // pred_region
          %s316 = sand.u32 %s26, 1
          %s317 = scalar_lea.sflag [#allocation7], %s316
          %s318 = sand.u32 %s115, 1
          %s319 = smul.addr %s318, 16
          %s320 = scalar_lea.vmem [#allocation8], %s319
          %s321 = smul.u32 4, %s35
          %s323 = ssub.s32 256, 256
          %324 = vsyncadd %s317, %s323
          %s325 = smul.addr %s33, 4
          %s326 = sadd.s32 %s321, %s325
          %s327 = smul.addr %s326, 64
          %s328 = scalar_lea.hbm %s2, %s327
          %s329 = sshll.u32 %s320, 4
          %s330 = int_to_ptr.vmem [resolvable:$true] %s329
          %335 = dma.hbm_to_vmem [thread:$0]  %s328, 256, %s330, %s317, 64, 64, 4
        $region36: #{tpu_custom_call.1} parent=23 // pred_fallthru
          _
      $region24: #{tpu_custom_call.1} parent=5 // pred_fallthru
        _
      %p336 = scmp.le.s32.totalorder 1, %s26
      %p337 = scmp.lt.s32.totalorder %s26, 3
      %p338 = pnand %p336, %p337
      %p339 = pneg %p338
      // Predicated region
      $region37: #{tpu_custom_call.1} parent=5 // pred_check
        _
      $region38: #{tpu_custom_call.1} parent=5 // pred_check_branch
        %341 = sbr.rel (%p338) target = $region40
      $region39: #{tpu_custom_call.1} parent=5 // pred_region
        %s342 = ssub.s32 %s26, 1
        %s343 = sand.u32 %s62, 1
        %s344 = scalar_lea.sflag [#allocation4], %s343
        %s345 = sand.u32 %s62, 1
        %s346 = smul.addr %s345, 16
        %s347 = scalar_lea.vmem [#allocation3], %s346
        // Predicated region
        $region41: #{tpu_custom_call.1} parent=39 // pred_check
          %p348 = pneg %p75
        $region42: #{tpu_custom_call.1} parent=39 // pred_check_branch
          %350 = sbr.rel (%p348) target = $region44
        $region43: #{tpu_custom_call.1} parent=39 // pred_region
          %351 = dma.done %s344, 256
        $region44: #{tpu_custom_call.1} parent=39 // pred_fallthru
          _
        %s352 = sand.u32 %s31, 1
        %s353 = scalar_lea.sflag [#allocation7], %s352
        %s354 = sand.u32 %s90, 1
        %s355 = smul.addr %s354, 16
        %s356 = scalar_lea.vmem [#allocation6], %s355
        // Predicated region
        $region45: #{tpu_custom_call.1} parent=39 // pred_check
          %p357 = pneg %p103
        $region46: #{tpu_custom_call.1} parent=39 // pred_check_branch
          %359 = sbr.rel (%p357) target = $region48
        $region47: #{tpu_custom_call.1} parent=39 // pred_region
          %360 = dma.done %s353, 256
        $region48: #{tpu_custom_call.1} parent=39 // pred_fallthru
          _
        %s361 = sand.u32 %s31, 1
        %s362 = scalar_lea.sflag [#allocation7], %s361
        %s363 = sand.u32 %s118, 1
        %s364 = smul.addr %s363, 16
        %s365 = scalar_lea.vmem [#allocation8], %s364
        // Predicated region
        $region49: #{tpu_custom_call.1} parent=39 // pred_check
          %p366 = pneg %p131
        $region50: #{tpu_custom_call.1} parent=39 // pred_check_branch
          %368 = sbr.rel (%p366) target = $region52
        $region51: #{tpu_custom_call.1} parent=39 // pred_region
          %369 = dma.done %s362, 256
        $region52: #{tpu_custom_call.1} parent=39 // pred_fallthru
          _
        // Predicated region
        $region53: #{tpu_custom_call.1} parent=39 // pred_check
          %p370 = pneg %p152
        $region54: #{tpu_custom_call.1} parent=39 // pred_check_branch
          %372 = sbr.rel (%p370) target = $region56
        $region55: #{tpu_custom_call.1} parent=39 // pred_region
          %373 = dma.done [#allocation10], 256
        $region56: #{tpu_custom_call.1} parent=39 // pred_fallthru
          _
        %s374 = sand.u32 %s62, 1
        %s375 = scalar_lea.sflag [#allocation4], %s374
        %s376 = sand.u32 %s62, 1
        %s377 = smul.addr %s376, 16
        %s378 = scalar_lea.vmem [#allocation3], %s377
        %p379 = pneg %p75
        %p380 = pneg %p72
        %s381 = sand.u32 %s31, 1
        %s382 = scalar_lea.sflag [#allocation7], %s381
        %s383 = sand.u32 %s90, 1
        %s384 = smul.addr %s383, 16
        %s385 = scalar_lea.vmem [#allocation6], %s384
        %p386 = pneg %p103
        %p387 = pneg %p100
        %s388 = sand.u32 %s31, 1
        %s389 = scalar_lea.sflag [#allocation7], %s388
        %s390 = sand.u32 %s118, 1
        %s391 = smul.addr %s390, 16
        %s392 = scalar_lea.vmem [#allocation8], %s391
        %p393 = pneg %p131
        %p394 = pneg %p128
        %p395 = pneg %p152
        %p396 = pneg %p149
        %p397 = pneg %p173
        %p398 = pneg %p170
        %p399 = pneg %p201
        %p400 = pneg %p198
        %s401 = sand.u32 %s188, 1
        %s402 = scalar_lea.sflag [#allocation5], %s401
        %s403 = sand.u32 %s188, 1
        %s404 = smul.addr %s403, 8
        %s405 = scalar_lea.vmem [#allocation11], %s404
        %p406 = pneg %p231
        %p407 = pneg %p228
        %s408 = sand.u32 %s218, 1
        %s409 = scalar_lea.sflag [#allocation13], %s408
        %s410 = sand.u32 %s218, 1
        %s411 = smul.addr %s410, 16
        %s412 = scalar_lea.vmem [#allocation12], %s411
        %s413 = smul.u32 4, %s38
        %s414 = smul.u32 4, %s38
        %s415 = smul.u32 4, %s38
        %s416 = smul.u32 4, %s38
        %v418 = vld [vmem:[%s347] sm:$0xf]
        %v419 = vld [vmem:[%s356] sm:$0xf]
        %v420 = vld [vmem:[%s365] sm:$0xf]
        %vm421 = vcmask 64512
        %v423 = vsel %vm421, %v418, 0
        %v426 = vsel %vm421, %v419, 0
        %428 = vmatprep.subr.bf16.mxu0 0
        %429 = vmatpush1.bf16.xpose.msra.mxu0 %v426
        %430 = vmatprep.subr.bf16.mxu0 0
        %431 = vmatpush1.bf16.xpose.msra.mxu0 0
        %432 = vmatprep.subr.bf16.mxu0 0
        %433 = vmatpush1.bf16.xpose.msra.mxu0 0
        %434 = vmatprep.subr.bf16.mxu0 0
        %435 = vmatpush1.bf16.xpose.msra.mxu0 0
        %436 = vmatprep.subr.bf16.mxu0 0
        %437 = vmatpush1.bf16.xpose.msra.mxu0 0
        %438 = vmatprep.subr.bf16.mxu0 0
        %439 = vmatpush1.bf16.xpose.msra.mxu0 0
        %440 = vmatprep.subr.bf16.mxu0 0
        %441 = vmatpush1.bf16.xpose.msra.mxu0 0
        %442 = vmatprep.subr.bf16.mxu0 0
        %443 = vmatpush1.bf16.xpose.msra.mxu0 0
        %444 = vmatprep.subr.bf16.mxu0 0
        %445 = vmatpush1.bf16.xpose.msra.mxu0 0
        %446 = vmatprep.subr.bf16.mxu0 0
        %447 = vmatpush1.bf16.xpose.msra.mxu0 0
        %448 = vmatprep.subr.bf16.mxu0 0
        %449 = vmatpush1.bf16.xpose.msra.mxu0 0
        %450 = vmatprep.subr.bf16.mxu0 0
        %451 = vmatpush1.bf16.xpose.msra.mxu0 0
        %452 = vmatprep.subr.bf16.mxu0 0
        %453 = vmatpush1.bf16.xpose.msra.mxu0 0
        %454 = vmatprep.subr.bf16.mxu0 0
        %455 = vmatpush1.bf16.xpose.msra.mxu0 0
        %456 = vmatprep.subr.bf16.mxu0 0
        %457 = vmatpush1.bf16.xpose.msra.mxu0 0
        %458 = vmatprep.subr.bf16.mxu0 0
        %459 = vmatpush1.bf16.xpose.msra.mxu0 0
        %460 = vmatprep.mubr.bf16.mxu0 0
        %461 = vmatmul.mubr.bf16.gmra.mrb[0].mxu0 %v423
        %v462 = vpop.f32.mrb[0].mxu0
        %v463 = vadd.f32 0.0, %v462
        %v464 = vpop.f32.mrb[0].mxu0
        %v465 = vpop.f32.mrb[0].mxu0
        %v466 = vpop.f32.mrb[0].mxu0
        %467 = vdwg.mxu0
        %v468 = vsel %vm421, %v463, -inf
        %469 = vmax.xlane.f32.xlu0 %v468
        %v470 = vpop.xlane.xlu0 %469
        %v471 = vsub.f32 %v463, %v470
        %v472 = vmul.f32 %v471, 1.442695
        %v473 = vpow.pop %v472
        %v474 = vsel %vm421, %v473, 0.0
        %475 = vadd.xlane.f32.xlu0 %v474
        %v476 = vpop.xlane.xlu0 %475
        %v477 = vrcp.pop %v476
        %v478 = vmul.f32 %v473, %v477
        %v479 = vpack.c.bf16 %v478, %v478
        %vm480 = vcmask 60416
        %481 = vst.msk [vmem:[%s412] sm:$0xf] %vm480, %v479
        %v483 = vsel %vm421, %v479, 0
        %vm485 = vcmask 1043456
        %v487 = vsel %vm485, %v420, 0
        %489 = vmatprep.subr.bf16.mxu0 0
        %490 = vmatpush1.bf16.msra.mxu0 %v487
        %491 = vmatprep.subr.bf16.mxu0 0
        %492 = vmatpush1.bf16.msra.mxu0 0
        %493 = vmatprep.subr.bf16.mxu0 0
        %494 = vmatpush1.bf16.msra.mxu0 0
        %495 = vmatprep.subr.bf16.mxu0 0
        %496 = vmatpush1.bf16.msra.mxu0 0
        %497 = vmatprep.subr.bf16.mxu0 0
        %498 = vmatpush1.bf16.msra.mxu0 0
        %499 = vmatprep.subr.bf16.mxu0 0
        %500 = vmatpush1.bf16.msra.mxu0 0
        %501 = vmatprep.subr.bf16.mxu0 0
        %502 = vmatpush1.bf16.msra.mxu0 0
        %503 = vmatprep.subr.bf16.mxu0 0
        %504 = vmatpush1.bf16.msra.mxu0 0
        %505 = vmatprep.subr.bf16.mxu0 0
        %506 = vmatpush1.bf16.msra.mxu0 0
        %507 = vmatprep.subr.bf16.mxu0 0
        %508 = vmatpush1.bf16.msra.mxu0 0
        %509 = vmatprep.subr.bf16.mxu0 0
        %510 = vmatpush1.bf16.msra.mxu0 0
        %511 = vmatprep.subr.bf16.mxu0 0
        %512 = vmatpush1.bf16.msra.mxu0 0
        %513 = vmatprep.subr.bf16.mxu0 0
        %514 = vmatpush1.bf16.msra.mxu0 0
        %515 = vmatprep.subr.bf16.mxu0 0
        %516 = vmatpush1.bf16.msra.mxu0 0
        %517 = vmatprep.subr.bf16.mxu0 0
        %518 = vmatpush1.bf16.msra.mxu0 0
        %519 = vmatprep.subr.bf16.mxu0 0
        %520 = vmatpush1.bf16.msra.mxu0 0
        %521 = vmatprep.mubr.bf16.mxu0 0
        %522 = vmatmul.mubr.bf16.gmra.mrb[0].mxu0 %v483
        %v523 = vpop.f32.mrb[0].mxu0
        %v524 = vadd.f32 0.0, %v523
        %v525 = vpop.f32.mrb[0].mxu0
        %v526 = vpop.f32.mrb[0].mxu0
        %v527 = vpop.f32.mrb[0].mxu0
        %528 = vdwg.mxu0
        %v529 = vpack.c.bf16 %v524, %v524
        %s530 = scalar_lea.vmem %s347, 4 [#allocation3]
        %v531 = vld [vmem:[%s530] sm:$0xf]
        %s532 = scalar_lea.vmem %s356, 4 [#allocation6]
        %v533 = vld [vmem:[%s532] sm:$0xf]
        %s534 = scalar_lea.vmem %s365, 4 [#allocation8]
        %v535 = vld [vmem:[%s534] sm:$0xf]
        %v537 = vsel %vm421, %v531, 0
        %v540 = vsel %vm421, %v533, 0
        %542 = vmatprep.subr.bf16.mxu0 0
        %543 = vmatpush1.bf16.xpose.msra.mxu0 %v540
        %544 = vmatprep.subr.bf16.mxu0 0
        %545 = vmatpush1.bf16.xpose.msra.mxu0 0
        %546 = vmatprep.subr.bf16.mxu0 0
        %547 = vmatpush1.bf16.xpose.msra.mxu0 0
        %548 = vmatprep.subr.bf16.mxu0 0
        %549 = vmatpush1.bf16.xpose.msra.mxu0 0
        %550 = vmatprep.subr.bf16.mxu0 0
        %551 = vmatpush1.bf16.xpose.msra.mxu0 0
        %552 = vmatprep.subr.bf16.mxu0 0
        %553 = vmatpush1.bf16.xpose.msra.mxu0 0
        %554 = vmatprep.subr.bf16.mxu0 0
        %555 = vmatpush1.bf16.xpose.msra.mxu0 0
        %556 = vmatprep.subr.bf16.mxu0 0
        %557 = vmatpush1.bf16.xpose.msra.mxu0 0
        %558 = vmatprep.subr.bf16.mxu0 0
        %559 = vmatpush1.bf16.xpose.msra.mxu0 0
        %560 = vmatprep.subr.bf16.mxu0 0
        %561 = vmatpush1.bf16.xpose.msra.mxu0 0
        %562 = vmatprep.subr.bf16.mxu0 0
        %563 = vmatpush1.bf16.xpose.msra.mxu0 0
        %564 = vmatprep.subr.bf16.mxu0 0
        %565 = vmatpush1.bf16.xpose.msra.mxu0 0
        %566 = vmatprep.subr.bf16.mxu0 0
        %567 = vmatpush1.bf16.xpose.msra.mxu0 0
        %568 = vmatprep.subr.bf16.mxu0 0
        %569 = vmatpush1.bf16.xpose.msra.mxu0 0
        %570 = vmatprep.subr.bf16.mxu0 0
        %571 = vmatpush1.bf16.xpose.msra.mxu0 0
        %572 = vmatprep.subr.bf16.mxu0 0
        %573 = vmatpush1.bf16.xpose.msra.mxu0 0
        %574 = vmatprep.mubr.bf16.mxu0 0
        %575 = vmatmul.mubr.bf16.gmra.mrb[0].mxu0 %v537
        %v576 = vpop.f32.mrb[0].mxu0
        %v577 = vadd.f32 0.0, %v576
        %v578 = vpop.f32.mrb[0].mxu0
        %v579 = vpop.f32.mrb[0].mxu0
        %v580 = vpop.f32.mrb[0].mxu0
        %581 = vdwg.mxu0
        %v582 = vsel %vm421, %v577, -inf
        %583 = vmax.xlane.f32.xlu0 %v582
        %v584 = vpop.xlane.xlu0 %583
        %v585 = vsub.f32 %v577, %v584
        %v586 = vmul.f32 %v585, 1.442695
        %v587 = vpow.pop %v586
        %v588 = vsel %vm421, %v587, 0.0
        %589 = vadd.xlane.f32.xlu0 %v588
        %v590 = vpop.xlane.xlu0 %589
        %v591 = vrcp.pop %v590
        %v592 = vmul.f32 %v587, %v591
        %v593 = vpack.c.bf16 %v592, %v592
        %s594 = scalar_lea.vmem %s412, 4 [#allocation12]
        %595 = vst.msk [vmem:[%s594] sm:$0xf] %vm480, %v593
        %v597 = vsel %vm421, %v593, 0
        %v600 = vsel %vm485, %v535, 0
        %602 = vmatprep.subr.bf16.mxu0 0
        %603 = vmatpush1.bf16.msra.mxu0 %v600
        %604 = vmatprep.subr.bf16.mxu0 0
        %605 = vmatpush1.bf16.msra.mxu0 0
        %606 = vmatprep.subr.bf16.mxu0 0
        %607 = vmatpush1.bf16.msra.mxu0 0
        %608 = vmatprep.subr.bf16.mxu0 0
        %609 = vmatpush1.bf16.msra.mxu0 0
        %610 = vmatprep.subr.bf16.mxu0 0
        %611 = vmatpush1.bf16.msra.mxu0 0
        %612 = vmatprep.subr.bf16.mxu0 0
        %613 = vmatpush1.bf16.msra.mxu0 0
        %614 = vmatprep.subr.bf16.mxu0 0
        %615 = vmatpush1.bf16.msra.mxu0 0
        %616 = vmatprep.subr.bf16.mxu0 0
        %617 = vmatpush1.bf16.msra.mxu0 0
        %618 = vmatprep.subr.bf16.mxu0 0
        %619 = vmatpush1.bf16.msra.mxu0 0
        %620 = vmatprep.subr.bf16.mxu0 0
        %621 = vmatpush1.bf16.msra.mxu0 0
        %622 = vmatprep.subr.bf16.mxu0 0
        %623 = vmatpush1.bf16.msra.mxu0 0
        %624 = vmatprep.subr.bf16.mxu0 0
        %625 = vmatpush1.bf16.msra.mxu0 0
        %626 = vmatprep.subr.bf16.mxu0 0
        %627 = vmatpush1.bf16.msra.mxu0 0
        %628 = vmatprep.subr.bf16.mxu0 0
        %629 = vmatpush1.bf16.msra.mxu0 0
        %630 = vmatprep.subr.bf16.mxu0 0
        %631 = vmatpush1.bf16.msra.mxu0 0
        %632 = vmatprep.subr.bf16.mxu0 0
        %633 = vmatpush1.bf16.msra.mxu0 0
        %634 = vmatprep.mubr.bf16.mxu0 0
        %635 = vmatmul.mubr.bf16.gmra.mrb[0].mxu0 %v597
        %v636 = vpop.f32.mrb[0].mxu0
        %v637 = vadd.f32 0.0, %v636
        %v638 = vpop.f32.mrb[0].mxu0
        %v639 = vpop.f32.mrb[0].mxu0
        %v640 = vpop.f32.mrb[0].mxu0
        %641 = vdwg.mxu0
        %v642 = vpack.c.bf16 %v637, %v637
        %s643 = scalar_lea.vmem %s347, 8 [#allocation3]
        %v644 = vld [vmem:[%s643] sm:$0xf]
        %s645 = scalar_lea.vmem %s356, 8 [#allocation6]
        %v646 = vld [vmem:[%s645] sm:$0xf]
        %s647 = scalar_lea.vmem %s365, 8 [#allocation8]
        %v648 = vld [vmem:[%s647] sm:$0xf]
        %v650 = vsel %vm421, %v644, 0
        %v653 = vsel %vm421, %v646, 0
        %655 = vmatprep.subr.bf16.mxu0 0
        %656 = vmatpush1.bf16.xpose.msra.mxu0 %v653
        %657 = vmatprep.subr.bf16.mxu0 0
        %658 = vmatpush1.bf16.xpose.msra.mxu0 0
        %659 = vmatprep.subr.bf16.mxu0 0
        %660 = vmatpush1.bf16.xpose.msra.mxu0 0
        %661 = vmatprep.subr.bf16.mxu0 0
        %662 = vmatpush1.bf16.xpose.msra.mxu0 0
        %663 = vmatprep.subr.bf16.mxu0 0
        %664 = vmatpush1.bf16.xpose.msra.mxu0 0
        %665 = vmatprep.subr.bf16.mxu0 0
        %666 = vmatpush1.bf16.xpose.msra.mxu0 0
        %667 = vmatprep.subr.bf16.mxu0 0
        %668 = vmatpush1.bf16.xpose.msra.mxu0 0
        %669 = vmatprep.subr.bf16.mxu0 0
        %670 = vmatpush1.bf16.xpose.msra.mxu0 0
        %671 = vmatprep.subr.bf16.mxu0 0
        %672 = vmatpush1.bf16.xpose.msra.mxu0 0
        %673 = vmatprep.subr.bf16.mxu0 0
        %674 = vmatpush1.bf16.xpose.msra.mxu0 0
        %675 = vmatprep.subr.bf16.mxu0 0
        %676 = vmatpush1.bf16.xpose.msra.mxu0 0
        %677 = vmatprep.subr.bf16.mxu0 0
        %678 = vmatpush1.bf16.xpose.msra.mxu0 0
        %679 = vmatprep.subr.bf16.mxu0 0
        %680 = vmatpush1.bf16.xpose.msra.mxu0 0
        %681 = vmatprep.subr.bf16.mxu0 0
        %682 = vmatpush1.bf16.xpose.msra.mxu0 0
        %683 = vmatprep.subr.bf16.mxu0 0
        %684 = vmatpush1.bf16.xpose.msra.mxu0 0
        %685 = vmatprep.subr.bf16.mxu0 0
        %686 = vmatpush1.bf16.xpose.msra.mxu0 0
        %687 = vmatprep.mubr.bf16.mxu0 0
        %688 = vmatmul.mubr.bf16.gmra.mrb[0].mxu0 %v650
        %v689 = vpop.f32.mrb[0].mxu0
        %v690 = vadd.f32 0.0, %v689
        %v691 = vpop.f32.mrb[0].mxu0
        %v692 = vpop.f32.mrb[0].mxu0
        %v693 = vpop.f32.mrb[0].mxu0
        %694 = vdwg.mxu0
        %v695 = vsel %vm421, %v690, -inf
        %696 = vmax.xlane.f32.xlu0 %v695
        %v697 = vpop.xlane.xlu0 %696
        %v698 = vsub.f32 %v690, %v697
        %v699 = vmul.f32 %v698, 1.442695
        %v700 = vpow.pop %v699
        %v701 = vsel %vm421, %v700, 0.0
        %702 = vadd.xlane.f32.xlu0 %v701
        %v703 = vpop.xlane.xlu0 %702
        %v704 = vrcp.pop %v703
        %v705 = vmul.f32 %v700, %v704
        %v706 = vpack.c.bf16 %v705, %v705
        %s707 = scalar_lea.vmem %s412, 8 [#allocation12]
        %708 = vst.msk [vmem:[%s707] sm:$0xf] %vm480, %v706
        %v710 = vsel %vm421, %v706, 0
        %v713 = vsel %vm485, %v648, 0
        %715 = vmatprep.subr.bf16.mxu0 0
        %716 = vmatpush1.bf16.msra.mxu0 %v713
        %717 = vmatprep.subr.bf16.mxu0 0
        %718 = vmatpush1.bf16.msra.mxu0 0
        %719 = vmatprep.subr.bf16.mxu0 0
        %720 = vmatpush1.bf16.msra.mxu0 0
        %721 = vmatprep.subr.bf16.mxu0 0
        %722 = vmatpush1.bf16.msra.mxu0 0
        %723 = vmatprep.subr.bf16.mxu0 0
        %724 = vmatpush1.bf16.msra.mxu0 0
        %725 = vmatprep.subr.bf16.mxu0 0
        %726 = vmatpush1.bf16.msra.mxu0 0
        %727 = vmatprep.subr.bf16.mxu0 0
        %728 = vmatpush1.bf16.msra.mxu0 0
        %729 = vmatprep.subr.bf16.mxu0 0
        %730 = vmatpush1.bf16.msra.mxu0 0
        %731 = vmatprep.subr.bf16.mxu0 0
        %732 = vmatpush1.bf16.msra.mxu0 0
        %733 = vmatprep.subr.bf16.mxu0 0
        %734 = vmatpush1.bf16.msra.mxu0 0
        %735 = vmatprep.subr.bf16.mxu0 0
        %736 = vmatpush1.bf16.msra.mxu0 0
        %737 = vmatprep.subr.bf16.mxu0 0
        %738 = vmatpush1.bf16.msra.mxu0 0
        %739 = vmatprep.subr.bf16.mxu0 0
        %740 = vmatpush1.bf16.msra.mxu0 0
        %741 = vmatprep.subr.bf16.mxu0 0
        %742 = vmatpush1.bf16.msra.mxu0 0
        %743 = vmatprep.subr.bf16.mxu0 0
        %744 = vmatpush1.bf16.msra.mxu0 0
        %745 = vmatprep.subr.bf16.mxu0 0
        %746 = vmatpush1.bf16.msra.mxu0 0
        %747 = vmatprep.mubr.bf16.mxu0 0
        %748 = vmatmul.mubr.bf16.gmra.mrb[0].mxu0 %v710
        %v749 = vpop.f32.mrb[0].mxu0
        %v750 = vadd.f32 0.0, %v749
        %v751 = vpop.f32.mrb[0].mxu0
        %v752 = vpop.f32.mrb[0].mxu0
        %v753 = vpop.f32.mrb[0].mxu0
        %754 = vdwg.mxu0
        %v755 = vpack.c.bf16 %v750, %v750
        %s756 = scalar_lea.vmem %s347, 12 [#allocation3]
        %v757 = vld [vmem:[%s756] sm:$0xf]
        %s758 = scalar_lea.vmem %s356, 12 [#allocation6]
        %v759 = vld [vmem:[%s758] sm:$0xf]
        %s760 = scalar_lea.vmem %s365, 12 [#allocation8]
        %v761 = vld [vmem:[%s760] sm:$0xf]
        %v763 = vsel %vm421, %v757, 0
        %v766 = vsel %vm421, %v759, 0
        %768 = vmatprep.subr.bf16.mxu0 0
        %769 = vmatpush1.bf16.xpose.msra.mxu0 %v766
        %770 = vmatprep.subr.bf16.mxu0 0
        %771 = vmatpush1.bf16.xpose.msra.mxu0 0
        %772 = vmatprep.subr.bf16.mxu0 0
        %773 = vmatpush1.bf16.xpose.msra.mxu0 0
        %774 = vmatprep.subr.bf16.mxu0 0
        %775 = vmatpush1.bf16.xpose.msra.mxu0 0
        %776 = vmatprep.subr.bf16.mxu0 0
        %777 = vmatpush1.bf16.xpose.msra.mxu0 0
        %778 = vmatprep.subr.bf16.mxu0 0
        %779 = vmatpush1.bf16.xpose.msra.mxu0 0
        %780 = vmatprep.subr.bf16.mxu0 0
        %781 = vmatpush1.bf16.xpose.msra.mxu0 0
        %782 = vmatprep.subr.bf16.mxu0 0
        %783 = vmatpush1.bf16.xpose.msra.mxu0 0
        %784 = vmatprep.subr.bf16.mxu0 0
        %785 = vmatpush1.bf16.xpose.msra.mxu0 0
        %786 = vmatprep.subr.bf16.mxu0 0
        %787 = vmatpush1.bf16.xpose.msra.mxu0 0
        %788 = vmatprep.subr.bf16.mxu0 0
        %789 = vmatpush1.bf16.xpose.msra.mxu0 0
        %790 = vmatprep.subr.bf16.mxu0 0
        %791 = vmatpush1.bf16.xpose.msra.mxu0 0
        %792 = vmatprep.subr.bf16.mxu0 0
        %793 = vmatpush1.bf16.xpose.msra.mxu0 0
        %794 = vmatprep.subr.bf16.mxu0 0
        %795 = vmatpush1.bf16.xpose.msra.mxu0 0
        %796 = vmatprep.subr.bf16.mxu0 0
        %797 = vmatpush1.bf16.xpose.msra.mxu0 0
        %798 = vmatprep.subr.bf16.mxu0 0
        %799 = vmatpush1.bf16.xpose.msra.mxu0 0
        %800 = vmatprep.mubr.bf16.mxu0 0
        %801 = vmatmul.mubr.bf16.gmra.mrb[0].mxu0 %v763
        %v802 = vpop.f32.mrb[0].mxu0
        %v803 = vadd.f32 0.0, %v802
        %v804 = vpop.f32.mrb[0].mxu0
        %v805 = vpop.f32.mrb[0].mxu0
        %v806 = vpop.f32.mrb[0].mxu0
        %807 = vdwg.mxu0
        %v808 = vsel %vm421, %v803, -inf
        %809 = vmax.xlane.f32.xlu0 %v808
        %v810 = vpop.xlane.xlu0 %809
        %v811 = vsub.f32 %v803, %v810
        %v812 = vmul.f32 %v811, 1.442695
        %v813 = vpow.pop %v812
        %v814 = vsel %vm421, %v813, 0.0
        %815 = vadd.xlane.f32.xlu0 %v814
        %v816 = vpop.xlane.xlu0 %815
        %v817 = vrcp.pop %v816
        %v818 = vmul.f32 %v813, %v817
        %v819 = vpack.c.bf16 %v818, %v818
        %s820 = scalar_lea.vmem %s412, 12 [#allocation12]
        %821 = vst.msk [vmem:[%s820] sm:$0xf] %vm480, %v819
        %v823 = vsel %vm421, %v819, 0
        %v826 = vsel %vm485, %v761, 0
        %828 = vmatprep.subr.bf16.mxu0 0
        %829 = vmatpush1.bf16.msra.mxu0 %v826
        %830 = vmatprep.subr.bf16.mxu0 0
        %831 = vmatpush1.bf16.msra.mxu0 0
        %832 = vmatprep.subr.bf16.mxu0 0
        %833 = vmatpush1.bf16.msra.mxu0 0
        %834 = vmatprep.subr.bf16.mxu0 0
        %835 = vmatpush1.bf16.msra.mxu0 0
        %836 = vmatprep.subr.bf16.mxu0 0
        %837 = vmatpush1.bf16.msra.mxu0 0
        %838 = vmatprep.subr.bf16.mxu0 0
        %839 = vmatpush1.bf16.msra.mxu0 0
        %840 = vmatprep.subr.bf16.mxu0 0
        %841 = vmatpush1.bf16.msra.mxu0 0
        %842 = vmatprep.subr.bf16.mxu0 0
        %843 = vmatpush1.bf16.msra.mxu0 0
        %844 = vmatprep.subr.bf16.mxu0 0
        %845 = vmatpush1.bf16.msra.mxu0 0
        %846 = vmatprep.subr.bf16.mxu0 0
        %847 = vmatpush1.bf16.msra.mxu0 0
        %848 = vmatprep.subr.bf16.mxu0 0
        %849 = vmatpush1.bf16.msra.mxu0 0
        %850 = vmatprep.subr.bf16.mxu0 0
        %851 = vmatpush1.bf16.msra.mxu0 0
        %852 = vmatprep.subr.bf16.mxu0 0
        %853 = vmatpush1.bf16.msra.mxu0 0
        %854 = vmatprep.subr.bf16.mxu0 0
        %855 = vmatpush1.bf16.msra.mxu0 0
        %856 = vmatprep.subr.bf16.mxu0 0
        %857 = vmatpush1.bf16.msra.mxu0 0
        %858 = vmatprep.subr.bf16.mxu0 0
        %859 = vmatpush1.bf16.msra.mxu0 0
        %860 = vmatprep.mubr.bf16.mxu0 0
        %861 = vmatmul.mubr.bf16.gmra.mrb[0].mxu0 %v823
        %v862 = vpop.f32.mrb[0].mxu0
        %v863 = vadd.f32 0.0, %v862
        %v864 = vpop.f32.mrb[0].mxu0
        %v865 = vpop.f32.mrb[0].mxu0
        %v866 = vpop.f32.mrb[0].mxu0
        %867 = vdwg.mxu0
        %v868 = vpack.c.bf16 %v863, %v863
        %870 = vrot.lane.b32.xlu0 %v642, 8
        %v871 = vpop.permute.xlu0 %870
        %873 = vrot.lane.b32.xlu0 %v755, 16
        %v874 = vpop.permute.xlu0 %873
        %876 = vrot.lane.b32.xlu0 %v868, 24
        %v877 = vpop.permute.xlu0 %876
        %v880 = vsel %vm421, %v529, %v871
        %vm881 = vcmask 130048
        %v883 = vsel %vm881, %v880, %v874
        %vm884 = vcmask 195584
        %v886 = vsel %vm884, %v883, %v877
        %v887 = vld [vmem:[#allocation9] sm:$0xf]
        %v888 = vld [vmem:[#allocation9 + $0x4] sm:$0xf]
        %v889 = vld [vmem:[#allocation9 + $0x8] sm:$0xf]
        %v890 = vld [vmem:[#allocation9 + $0xc] sm:$0xf]
        %v895 = vunpack.c.l.b16 %v887
        %v896 = vunpack.c.l.b16 %v888
        %v897 = vunpack.c.l.b16 %v889
        %v898 = vunpack.c.l.b16 %v890
        %v899 = vpack.c.b16 %v896, %v895
        %v900 = vpack.c.b16 %v898, %v897
        %vm903 = vcmask 261120
        %v904 = vsel %vm903, %v886, 0
        %906 = vmatprep.subr.bf16.mxu0 0
        %907 = vmatpush1.bf16.msra.mxu0 %v899
        %908 = vmatprep.subr.bf16.mxu0 0
        %909 = vmatpush1.bf16.msra.mxu0 %v900
        %910 = vmatprep.subr.bf16.mxu0 0
        %911 = vmatpush1.bf16.msra.mxu0 0
        %912 = vmatprep.subr.bf16.mxu0 0
        %913 = vmatpush1.bf16.msra.mxu0 0
        %914 = vmatprep.subr.bf16.mxu0 0
        %915 = vmatpush1.bf16.msra.mxu0 0
        %916 = vmatprep.subr.bf16.mxu0 0
        %917 = vmatpush1.bf16.msra.mxu0 0
        %918 = vmatprep.subr.bf16.mxu0 0
        %919 = vmatpush1.bf16.msra.mxu0 0
        %920 = vmatprep.subr.bf16.mxu0 0
        %921 = vmatpush1.bf16.msra.mxu0 0
        %922 = vmatprep.subr.bf16.mxu0 0
        %923 = vmatpush1.bf16.msra.mxu0 0
        %924 = vmatprep.subr.bf16.mxu0 0
        %925 = vmatpush1.bf16.msra.mxu0 0
        %926 = vmatprep.subr.bf16.mxu0 0
        %927 = vmatpush1.bf16.msra.mxu0 0
        %928 = vmatprep.subr.bf16.mxu0 0
        %929 = vmatpush1.bf16.msra.mxu0 0
        %930 = vmatprep.subr.bf16.mxu0 0
        %931 = vmatpush1.bf16.msra.mxu0 0
        %932 = vmatprep.subr.bf16.mxu0 0
        %933 = vmatpush1.bf16.msra.mxu0 0
        %934 = vmatprep.subr.bf16.mxu0 0
        %935 = vmatpush1.bf16.msra.mxu0 0
        %936 = vmatprep.subr.bf16.mxu0 0
        %937 = vmatpush1.bf16.msra.mxu0 0
        %938 = vmatprep.mubr.bf16.mxu0 0
        %939 = vmatmul.mubr.bf16.gmra.mrb[0].mxu0 %v904
        %v940 = vpop.f32.mrb[0].mxu0
        %v941 = vadd.f32 0.0, %v940
        %v942 = vpop.f32.mrb[0].mxu0
        %v943 = vpop.f32.mrb[0].mxu0
        %v944 = vpop.f32.mrb[0].mxu0
        %945 = vdwg.mxu0
        %p946 = scmp.eq.s32.totalorder %s38, 0
        // Predicated region
        $region57: #{tpu_custom_call.1} parent=39 // pred_check
          %p947 = pneg %p946
        $region58: #{tpu_custom_call.1} parent=39 // pred_check_branch
          %949 = sbr.rel (%p947) target = $region60
        $region59: #{tpu_custom_call.1} parent=39 // pred_region
          %v950 = vld [vmem:[%s4] sm:$0x1]
          %v952 = vlaneseq
          %v953 = vshrl.u32 %v952, 7
          %v954 = vsub.s32 0, %v953
          %v955 = vrot.slane %v950, %v954
          %957 = vst.msk [vmem:[#allocation2] sm:$0xff] %vm903, %v955
        $region60: #{tpu_custom_call.1} parent=39 // pred_fallthru
          _
        %v958 = vld [vmem:[#allocation2] sm:$0xff]
        %v959 = vadd.f32 %v958, %v941
        %960 = vst.msk [vmem:[#allocation2] sm:$0xff] %vm903, %v959
        // Predicated region
        $region61: #{tpu_custom_call.1} parent=39 // pred_check
          %p961 = pneg %p946
        $region62: #{tpu_custom_call.1} parent=39 // pred_check_branch
          %963 = sbr.rel (%p961) target = $region64
        $region63: #{tpu_custom_call.1} parent=39 // pred_region
          %v964 = vld [vmem:[#allocation2] sm:$0xff]
          %965 = vst.msk [vmem:[%s405] sm:$0xff] %vm903, %v964
        $region64: #{tpu_custom_call.1} parent=39 // pred_fallthru
          _
        %s966 = sand.u32 %s188, 1
        %s967 = scalar_lea.sflag [#allocation5], %s966
        %s968 = sand.u32 %s188, 1
        %s969 = smul.addr %s968, 8
        %s970 = scalar_lea.vmem [#allocation11], %s969
        %s971 = sand.u32 %s218, 1
        %s972 = scalar_lea.sflag [#allocation13], %s971
        %s973 = sand.u32 %s218, 1
        %s974 = smul.addr %s973, 16
        %s975 = scalar_lea.vmem [#allocation12], %s974
        // Predicated region
        $region65: #{tpu_custom_call.1} parent=39 // pred_check
          %p976 = pneg %p198
        $region66: #{tpu_custom_call.1} parent=39 // pred_check_branch
          %978 = sbr.rel (%p976) target = $region68
        $region67: #{tpu_custom_call.1} parent=39 // pred_region
          %s980 = ssub.s32 128, 128
          %981 = vsyncadd %s967, %s980
          %s982 = sadd.s32 %s37, %s36
          %s983 = smul.addr %s982, 128
          %s984 = scalar_lea.hbm %s5, %s983
          %s986 = sshll.u32 %s970, 4
          %s987 = int_to_ptr.vmem [resolvable:$true] %s986
          %989 = dma.vmem_to_hbm [thread:$0]  %s987, 128, %s984, %s967
        $region68: #{tpu_custom_call.1} parent=39 // pred_fallthru
          _
        // Predicated region
        $region69: #{tpu_custom_call.1} parent=39 // pred_check
          %p990 = pneg %p228
        $region70: #{tpu_custom_call.1} parent=39 // pred_check_branch
          %992 = sbr.rel (%p990) target = $region72
        $region71: #{tpu_custom_call.1} parent=39 // pred_region
          %s993 = smul.u32 4, %s38
          %s995 = ssub.s32 256, 256
          %996 = vsyncadd %s972, %s995
          %s997 = sadd.s32 %s37, %s993
          %s998 = smul.addr %s36, 4
          %s999 = sadd.s32 %s997, %s998
          %s1000 = smul.addr %s999, 64
          %s1001 = scalar_lea.hbm %s6, %s1000
          %s1002 = sshll.u32 %s975, 4
          %s1003 = int_to_ptr.vmem [resolvable:$true] %s1002
          %1008 = dma.vmem_to_hbm [thread:$0]  %s1003, 256, %s1001, %s972, 64, 64, 4
        $region72: #{tpu_custom_call.1} parent=39 // pred_fallthru
          _
      $region40: #{tpu_custom_call.1} parent=5 // pred_fallthru
        _
      %p1009 = scmp.le.s32.totalorder 2, %s26
      // Predicated region
      $region73: #{tpu_custom_call.1} parent=5 // pred_check
        %p1010 = pneg %p1009
      $region74: #{tpu_custom_call.1} parent=5 // pred_check_branch
        %1012 = sbr.rel (%p1010) target = $region76
      $region75: #{tpu_custom_call.1} parent=5 // pred_region
        %s1013 = ssub.s32 %s26, 2
        // Predicated region
        $region77: #{tpu_custom_call.1} parent=75 // pred_check
          %p1014 = pneg %p204
        $region78: #{tpu_custom_call.1} parent=75 // pred_check_branch
          %1016 = sbr.rel (%p1014) target = $region80
        $region79: #{tpu_custom_call.1} parent=75 // pred_region
          %s1017 = sand.u32 %s189, 1
          %s1018 = scalar_lea.sflag [#allocation5], %s1017
          %s1019 = sand.u32 %s189, 1
          %s1020 = smul.addr %s1019, 8
          %s1021 = scalar_lea.vmem [#allocation11], %s1020
          %1022 = dma.done %s1018, 128
        $region80: #{tpu_custom_call.1} parent=75 // pred_fallthru
          _
        // Predicated region
        $region81: #{tpu_custom_call.1} parent=75 // pred_check
          %p1023 = pneg %p234
        $region82: #{tpu_custom_call.1} parent=75 // pred_check_branch
          %1025 = sbr.rel (%p1023) target = $region84
        $region83: #{tpu_custom_call.1} parent=75 // pred_region
          %s1026 = sand.u32 %s219, 1
          %s1027 = scalar_lea.sflag [#allocation13], %s1026
          %s1028 = sand.u32 %s219, 1
          %s1029 = smul.addr %s1028, 16
          %s1030 = scalar_lea.vmem [#allocation12], %s1029
          %1031 = dma.done %s1027, 256
        $region84: #{tpu_custom_call.1} parent=75 // pred_fallthru
          _
      $region76: #{tpu_custom_call.1} parent=5 // pred_fallthru
        _
    $region6: #{tpu_custom_call.1} parent=1 // loop_footer
      %s30 = sadd.s32 1, %s26
    $region7: #{tpu_custom_call.1} parent=1 // loop_footer_branch
      %25 = sbr.rel target = $region3
    $region8: #{tpu_custom_call.1} parent=1 // loop_exit
      _
    %1032 = vsyncpa [#allocation4], 1
    %s1033 = scalar_lea.sflag [#allocation4], 1
    %1034 = vsyncpa %s1033, 1
    %1035 = vsyncpa [#allocation7], 1
    %s1036 = scalar_lea.sflag [#allocation7], 1
    %1037 = vsyncpa %s1036, 1
    %1038 = vsyncpa [#allocation10], 1
    %1039 = vsyncpa [#allocation5], 1
    %s1040 = scalar_lea.sflag [#allocation5], 1
    %1041 = vsyncpa %s1040, 1
    %1042 = vsyncpa [#allocation13], 1
    %s1043 = scalar_lea.sflag [#allocation13], 1
    %1044 = vsyncpa %s1043, 1

</llo_original>
